<compile_context>
chip_gen: v7x
topology: tpu7x:2x2x1
jax: 0.10.0
libtpu: 0.0.40
codegen_flags: <defaults>
</compile_context>

<pallas_src>
import functools

import jax
import jax.numpy as jnp
from jax.experimental import pallas as pl
from jax.experimental.pallas import tpu as pltpu


def _round_up(x, m):
    return ((x + m - 1) // m) * m


# ----------------------------- Pallas kernel --------------------------------
def _cvae_traj_kernel(
    emb_ref,    # [T, D]   bf16  pred-hand token embeddings
    eps_ref,    # [T, L]   bf16  reparameterization noise
    side_ref,   # [T, 4]   f32   [fh_x | fh_y | future_valid | pad_mask]
    we_x_ref,   # [D, H]   bf16  encoder weight (embedding part)
    we_y_ref,   # [2, H]   bf16  encoder weight (target-coords part)
    w_mu_ref,   # [H, L]   bf16
    w_lv_ref,   # [H, L]   bf16
    wd_z_ref,   # [L, H]   bf16  decoder weight (latent part)
    wd_x_ref,   # [D, H]   bf16  decoder weight (embedding part)
    w_out_ref,  # [H, 2]   bf16
    bias_ref,   # [5, Bmax] f32  rows: be, b_mu, b_lv, bd, bo
    out_ref,    # [1, 8, 128] f32 per-chunk partials (sublane 0 = se, 1 = kl)
    *, D, L, H,
):
    emb = emb_ref[...]                        # (T, D) bf16
    eps = eps_ref[...].astype(jnp.float32)    # (T, L) f32
    side = side_ref[...]                      # (T, 4) f32
    fh = side[:, 0:2]                         # targets
    valid = side[:, 2:3]                      # future_valid mask
    pmask = side[:, 3:4]                      # pad-row mask

    b = bias_ref[...]
    be = b[0:1, :H]
    b_mu = b[1:2, :L]
    b_lv = b[2:3, :L]
    bd = b[3:4, :H]
    bo = b[4:5, :2]

    # Encoder: relu(emb @ We_x + fh @ We_y + be)   (no activation concat)
    h = (jnp.dot(emb, we_x_ref[...], preferred_element_type=jnp.float32)
         + jnp.dot(fh.astype(jnp.bfloat16), we_y_ref[...],
                   preferred_element_type=jnp.float32)
         + be)
    h = jnp.maximum(h, 0.0)
    h_bf = h.astype(jnp.bfloat16)

    mu = jnp.dot(h_bf, w_mu_ref[...], preferred_element_type=jnp.float32) + b_mu
    logvar = jnp.dot(h_bf, w_lv_ref[...],
                     preferred_element_type=jnp.float32) + b_lv

    # Reparameterization (single transcendental; sigma reused as sigma^2).
    s = jnp.exp(0.5 * logvar)
    z = mu + s * eps

    # Decoder: relu(z @ Wd_z + emb @ Wd_x + bd) @ Wo + bo -> pred [T,2]
    h2 = (jnp.dot(z.astype(jnp.bfloat16), wd_z_ref[...],
                  preferred_element_type=jnp.float32)
          + jnp.dot(emb, wd_x_ref[...], preferred_element_type=jnp.float32)
          + bd)
    h2 = jnp.maximum(h2, 0.0)
    pred = jnp.dot(h2.astype(jnp.bfloat16), w_out_ref[...],
                   preferred_element_type=jnp.float32) + bo

    # Per-chunk partial losses (masked SE; KL masked only for padded rows to
    # preserve the original unmasked-over-invalid-hands KL semantics).
    diff = pred - fh
    se_tile = jnp.sum(diff * diff * valid)
    kl_tile = -0.5 * jnp.sum((1.0 + logvar - mu * mu - s * s) * pmask)

    # Lane-dense per-chunk output: each grid step owns one (8,128) block, so
    # the grid is fully parallel (megacore on v7x) and the final tiny f32 sum
    # happens in XLA.
    sub = jax.lax.broadcasted_iota(jnp.int32, (8, 128), 0)
    blk = jnp.where(sub == 0, se_tile, jnp.where(sub == 1, kl_tile, 0.0))
    out_ref[...] = blk.astype(jnp.float32).reshape(1, 8, 128)


def _run_cvae(emb, eps, side, weights, biases, *, D, L, H, tile_n):
    we_x, we_y, w_mu, w_lv, wd_z, wd_x, w_out = weights
    n_pad = emb.shape[0]
    assert n_pad % tile_n == 0
    grid = (n_pad // tile_n,)

    kernel = functools.partial(_cvae_traj_kernel, D=D, L=L, H=H)
    const = lambda i: (0, 0)

    weight_bytes = 2 * (we_x.size + we_y.size + w_mu.size + w_lv.size
                        + wd_z.size + wd_x.size + w_out.size)
    flops = 2 * n_pad * (D * H + 2 * H + 2 * (H * L) + L * H + D * H + H * 2)
    bytes_accessed = (2 * (emb.size + eps.size) + 4 * side.size
                      + weight_bytes + 4 * biases.size
                      + 4 * grid[0] * 8 * 128)
    cost = pl.CostEstimate(flops=flops, transcendentals=n_pad * L,
                           bytes_accessed=bytes_accessed)

    # VMEM budget: double-buffered data tiles + (double-buffered) resident
    # weights + output block.  Raise the scoped limit (v5e default is 16 MiB),
    # but cap at 64 MiB so the request is also valid on v7x.
    tile_bytes = tile_n * (2 * D + 2 * L + 4 * 4) + 8 * 128 * 4
    vmem_est = 2 * tile_bytes + 2 * (weight_bytes + 4 * biases.size)
    vmem_limit = int(min(max(4 * vmem_est, 32 * 1024 * 1024), 64 * 1024 * 1024))

    return pl.pallas_call(
        kernel,
        out_shape=jax.ShapeDtypeStruct((grid[0], 8, 128), jnp.float32),
        grid=grid,
        in_specs=[
            pl.BlockSpec((tile_n, D), lambda i: (i, 0)),   # emb tile (bf16)
            pl.BlockSpec((tile_n, L), lambda i: (i, 0)),   # eps tile (bf16)
            pl.BlockSpec((tile_n, 4), lambda i: (i, 0)),   # side slab (f32)
            pl.BlockSpec(we_x.shape, const),               # resident weights
            pl.BlockSpec(we_y.shape, const),
            pl.BlockSpec(w_mu.shape, const),
            pl.BlockSpec(w_lv.shape, const),
            pl.BlockSpec(wd_z.shape, const),
            pl.BlockSpec(wd_x.shape, const),
            pl.BlockSpec(w_out.shape, const),
            pl.BlockSpec(biases.shape, const),
        ],
        out_specs=pl.BlockSpec((1, 8, 128), lambda i: (i, 0, 0)),
        compiler_params=pltpu.CompilerParams(
            dimension_semantics=("parallel",),   # independent chunks
            vmem_limit_bytes=vmem_limit),
        cost_estimate=cost,
    )(emb, eps, side, we_x, we_y, w_mu, w_lv, wd_z, wd_x, w_out, biases)


# --------------------------- TrajDecoder wrapper -----------------------------
def traj_decoder_forward(params, *, pred_hand_embeddings, future_hands,
                         future_valid, lambda_traj, lambda_traj_kl, eps,
                         tile_n=256):
    """Mirrors TrajDecoder.forward; returns the loss dict."""
    weights, biases = params["weights"], params["biases"]
    we_x = weights[0]
    D, H = we_x.shape
    L = weights[2].shape[1]

    B = pred_hand_embeddings.shape[0]
    assert pred_hand_embeddings.shape == (B, 2, 4, D)
    assert future_hands.shape == (B, 2, 4, 2)
    assert future_valid.shape == (B, 2)
    N = B * 2 * 4

    # Embeddings / noise go in as bf16 (no-op cast if the caller already feeds
    # bf16); reshape is a view — there is no packed-slab concat copy anymore.
    emb = pred_hand_embeddings.reshape(N, D).astype(jnp.bfloat16)
    eps = eps.reshape(N, L).astype(jnp.bfloat16)

    fh = future_hands.reshape(N, 2).astype(jnp.float32)
    valid = jnp.repeat(future_valid.reshape(B * 2, 1).astype(jnp.float32),
                       4, axis=0)
    pmask = jnp.ones((N, 1), jnp.float32)
    side = jnp.concatenate([fh, valid, pmask], axis=1)     # (N, 4) — tiny

    # Tile choice: prefer the biggest MXU-aligned tile that divides N (no pad
    # copy of the embedding stream); otherwise round up (pad rows get
    # valid=0 / pmask=0 so they contribute nothing).  Never below 16 rows.
    tile = None
    for t in (1024, 512, 256, 128):
        if t <= tile_n and N % t == 0:
            tile = t
            break
    if tile is None:
        tile = max(16, min(_round_up(tile_n, 16), _round_up(N, 16)))
    n_pad = _round_up(N, tile)
    if n_pad != N:
        pad = n_pad - N
        emb = jnp.concatenate([emb, jnp.zeros((pad, D), emb.dtype)], axis=0)
        eps = jnp.concatenate([eps, jnp.zeros((pad, L), eps.dtype)], axis=0)
        side = jnp.concatenate([side, jnp.zeros((pad, 4), side.dtype)], axis=0)

    partials = _run_cvae(emb, eps, side, weights, biases,
                         D=D, L=L, H=H, tile_n=tile)
    se_sum = jnp.sum(partials[:, 0, 0])     # final 2-scalar reduce in f32 XLA
    kl_sum = jnp.sum(partials[:, 1, 0])

    loss = {}
    loss["traj_loss"] = lambda_traj * se_sum
    loss["traj_kl_loss"] = lambda_traj_kl * kl_sum
    loss["total_loss"] = loss["traj_loss"] + loss["traj_kl_loss"]
    return loss


# ------------------------------ parameter init -------------------------------
def init_params(key, token_dim, hidden, latent):
    """MXU-ready bf16 weights (keep f32 masters elsewhere if training)."""
    ks = jax.random.split(key, 7)
    s = 0.05

    def mk(k, shp):
        return (s * jax.random.normal(k, shp, jnp.float32)).astype(jnp.bfloat16)

    we_x = mk(ks[0], (token_dim, hidden))     # (D, H)
    we_y = mk(ks[1], (2, hidden))             # (2, H)
    w_mu = mk(ks[2], (hidden, latent))        # (H, L)
    w_lv = mk(ks[3], (hidden, latent))        # (H, L)
    wd_z = mk(ks[4], (latent, hidden))        # (L, H)
    wd_x = mk(ks[5], (token_dim, hidden))     # (D, H)
    w_out = mk(ks[6], (hidden, 2))            # (H, 2)

    bmax = _round_up(max(hidden, latent, 2), 128)
    biases = jnp.zeros((5, bmax), jnp.float32)  # rows: be, b_mu, b_lv, bd, bo
    return {"weights": (we_x, we_y, w_mu, w_lv, wd_z, wd_x, w_out),
            "biases": biases}


if __name__ == "__main__":
    B = 2
    TOKEN_DIM = 32
    HIDDEN = 64
    LATENT = 16
    N = B * 2 * 4

    key = jax.random.PRNGKey(0)
    k_emb, k_fh, k_eps, k_par = jax.random.split(key, 4)

    pred_hand_embeddings = jax.random.normal(
        k_emb, (B, 2, 4, TOKEN_DIM), jnp.float32).astype(jnp.bfloat16)
    future_hands = jax.random.uniform(k_fh, (B, 2, 4, 2), jnp.float32)
    future_valid = jnp.array([[1.0, 1.0], [1.0, 0.0]], jnp.float32)
    eps = jax.random.normal(k_eps, (N, LATENT), jnp.float32).astype(jnp.bfloat16)

    params = init_params(k_par, TOKEN_DIM, HIDDEN, LATENT)

    loss = traj_decoder_forward(
        params,
        pred_hand_embeddings=pred_hand_embeddings,
        future_hands=future_hands,
        future_valid=future_valid,
        lambda_traj=1.0,
        lambda_traj_kl=1e-3,
        eps=eps,
    )
    jax.block_until_ready(loss["total_loss"])
    print("KERNEL_OK")
</pallas_src>

<mosaic_0001>
module attributes {stable_mosaic.version = 11 : i64} {
  func.func @_cvae_traj_kernel(%arg0: i32, %arg1: memref<16x32xbf16, #tpu.memory_space<vmem>>, %arg2: memref<16x16xbf16, #tpu.memory_space<vmem>>, %arg3: memref<16x4xf32, #tpu.memory_space<vmem>>, %arg4: memref<32x64xbf16, #tpu.memory_space<vmem>>, %arg5: memref<2x64xbf16, #tpu.memory_space<vmem>>, %arg6: memref<64x16xbf16, #tpu.memory_space<vmem>>, %arg7: memref<64x16xbf16, #tpu.memory_space<vmem>>, %arg8: memref<16x64xbf16, #tpu.memory_space<vmem>>, %arg9: memref<32x64xbf16, #tpu.memory_space<vmem>>, %arg10: memref<64x2xbf16, #tpu.memory_space<vmem>>, %arg11: memref<5x128xf32, #tpu.memory_space<vmem>>, %arg12: memref<1x8x128xf32, #tpu.memory_space<vmem>>) attributes {dimension_semantics = [#tpu.dimension_semantics<parallel>], iteration_bounds = array<i64: 1>, scalar_prefetch = 0 : i64, scratch_operands = 0 : i64, tpu.core_type = #tpu.core_type<tc>, window_params = [{transform_indices = @transform_0, window_bounds = array<i64: 16, 32>}, {transform_indices = @transform_1, window_bounds = array<i64: 16, 16>}, {transform_indices = @transform_2, window_bounds = array<i64: 16, 4>}, {pipeline_mode = #tpu.pipeline_mode<synchronous>, transform_indices = @transform_3, window_bounds = array<i64: 32, 64>}, {pipeline_mode = #tpu.pipeline_mode<synchronous>, transform_indices = @transform_4, window_bounds = array<i64: 2, 64>}, {pipeline_mode = #tpu.pipeline_mode<synchronous>, transform_indices = @transform_5, window_bounds = array<i64: 64, 16>}, {pipeline_mode = #tpu.pipeline_mode<synchronous>, transform_indices = @transform_6, window_bounds = array<i64: 64, 16>}, {pipeline_mode = #tpu.pipeline_mode<synchronous>, transform_indices = @transform_7, window_bounds = array<i64: 16, 64>}, {pipeline_mode = #tpu.pipeline_mode<synchronous>, transform_indices = @transform_8, window_bounds = array<i64: 32, 64>}, {pipeline_mode = #tpu.pipeline_mode<synchronous>, transform_indices = @transform_9, window_bounds = array<i64: 64, 2>}, {pipeline_mode = #tpu.pipeline_mode<synchronous>, transform_indices = @transform_10, window_bounds = array<i64: 5, 128>}, {transform_indices = @transform_11, window_bounds = array<i64: 1, 8, 128>}]} {
    %c0 = arith.constant 0 : index
    %c0_0 = arith.constant 0 : index
    %0 = vector.load %arg1[%c0, %c0_0] : memref<16x32xbf16, #tpu.memory_space<vmem>>, vector<16x32xbf16>
    %c0_1 = arith.constant 0 : index
    %c0_2 = arith.constant 0 : index
    %1 = vector.load %arg2[%c0_1, %c0_2] : memref<16x16xbf16, #tpu.memory_space<vmem>>, vector<16x16xbf16>
    %2 = arith.extf %1 : vector<16x16xbf16> to vector<16x16xf32>
    %c0_3 = arith.constant 0 : index
    %c0_4 = arith.constant 0 : index
    %3 = vector.load %arg3[%c0_3, %c0_4] : memref<16x4xf32, #tpu.memory_space<vmem>>, vector<16x4xf32>
    %4 = vector.extract_strided_slice %3 {offsets = [0, 0], sizes = [16, 2], strides = [1, 1]} : vector<16x4xf32> to vector<16x2xf32>
    %5 = vector.extract_strided_slice %3 {offsets = [0, 2], sizes = [16, 1], strides = [1, 1]} : vector<16x4xf32> to vector<16x1xf32>
    %6 = vector.extract_strided_slice %3 {offsets = [0, 3], sizes = [16, 1], strides = [1, 1]} : vector<16x4xf32> to vector<16x1xf32>
    %c0_5 = arith.constant 0 : index
    %c0_6 = arith.constant 0 : index
    %7 = vector.load %arg11[%c0_5, %c0_6] : memref<5x128xf32, #tpu.memory_space<vmem>>, vector<5x128xf32>
    %8 = vector.extract_strided_slice %7 {offsets = [0, 0], sizes = [1, 64], strides = [1, 1]} : vector<5x128xf32> to vector<1x64xf32>
    %9 = vector.extract_strided_slice %7 {offsets = [1, 0], sizes = [1, 16], strides = [1, 1]} : vector<5x128xf32> to vector<1x16xf32>
    %10 = vector.extract_strided_slice %7 {offsets = [2, 0], sizes = [1, 16], strides = [1, 1]} : vector<5x128xf32> to vector<1x16xf32>
    %11 = vector.extract_strided_slice %7 {offsets = [3, 0], sizes = [1, 64], strides = [1, 1]} : vector<5x128xf32> to vector<1x64xf32>
    %12 = vector.extract_strided_slice %7 {offsets = [4, 0], sizes = [1, 2], strides = [1, 1]} : vector<5x128xf32> to vector<1x2xf32>
    %c0_7 = arith.constant 0 : index
    %c0_8 = arith.constant 0 : index
    %13 = vector.load %arg4[%c0_7, %c0_8] : memref<32x64xbf16, #tpu.memory_space<vmem>>, vector<32x64xbf16>
    %cst = arith.constant dense<0.000000e+00> : vector<16x64xf32>
    %14 = tpu.matmul %0, %13, %cst {dimension_numbers = #tpu.dot_dimension_numbers<[1], [0], [0], [1], [0, 0, 1, 1], [], []>} : vector<16x32xbf16>, vector<32x64xbf16>, vector<16x64xf32> -> vector<16x64xf32>
    %15 = arith.truncf %4 : vector<16x2xf32> to vector<16x2xbf16>
    %c0_9 = arith.constant 0 : index
    %c0_10 = arith.constant 0 : index
    %16 = vector.load %arg5[%c0_9, %c0_10] : memref<2x64xbf16, #tpu.memory_space<vmem>>, vector<2x64xbf16>
    %cst_11 = arith.constant dense<0.000000e+00> : vector<16x64xf32>
    %17 = tpu.matmul %15, %16, %cst_11 {dimension_numbers = #tpu.dot_dimension_numbers<[1], [0], [0], [1], [0, 0, 1, 1], [], []>} : vector<16x2xbf16>, vector<2x64xbf16>, vector<16x64xf32> -> vector<16x64xf32>
    %18 = arith.addf %14, %17 : vector<16x64xf32>
    %19 = vector.broadcast %8 : vector<1x64xf32> to vector<16x64xf32>
    %20 = arith.addf %18, %19 : vector<16x64xf32>
    %cst_12 = arith.constant 0.000000e+00 : f32
    %21 = vector.broadcast %cst_12 : f32 to vector<16x64xf32>
    %22 = arith.maximumf %20, %21 : vector<16x64xf32>
    %23 = arith.truncf %22 : vector<16x64xf32> to vector<16x64xbf16>
    %c0_13 = arith.constant 0 : index
    %c0_14 = arith.constant 0 : index
    %24 = vector.load %arg6[%c0_13, %c0_14] : memref<64x16xbf16, #tpu.memory_space<vmem>>, vector<64x16xbf16>
    %cst_15 = arith.constant dense<0.000000e+00> : vector<16x16xf32>
    %25 = tpu.matmul %23, %24, %cst_15 {dimension_numbers = #tpu.dot_dimension_numbers<[1], [0], [0], [1], [0, 0, 1, 1], [], []>} : vector<16x64xbf16>, vector<64x16xbf16>, vector<16x16xf32> -> vector<16x16xf32>
    %26 = vector.broadcast %9 : vector<1x16xf32> to vector<16x16xf32>
    %27 = arith.addf %25, %26 : vector<16x16xf32>
    %c0_16 = arith.constant 0 : index
    %c0_17 = arith.constant 0 : index
    %28 = vector.load %arg7[%c0_16, %c0_17] : memref<64x16xbf16, #tpu.memory_space<vmem>>, vector<64x16xbf16>
    %cst_18 = arith.constant dense<0.000000e+00> : vector<16x16xf32>
    %29 = tpu.matmul %23, %28, %cst_18 {dimension_numbers = #tpu.dot_dimension_numbers<[1], [0], [0], [1], [0, 0, 1, 1], [], []>} : vector<16x64xbf16>, vector<64x16xbf16>, vector<16x16xf32> -> vector<16x16xf32>
    %30 = vector.broadcast %10 : vector<1x16xf32> to vector<16x16xf32>
    %31 = arith.addf %29, %30 : vector<16x16xf32>
    %cst_19 = arith.constant 5.000000e-01 : f32
    %32 = vector.broadcast %cst_19 : f32 to vector<16x16xf32>
    %33 = arith.mulf %32, %31 : vector<16x16xf32>
    %34 = math.exp %33 : vector<16x16xf32>
    %35 = arith.mulf %34, %2 : vector<16x16xf32>
    %36 = arith.addf %27, %35 : vector<16x16xf32>
    %37 = arith.truncf %36 : vector<16x16xf32> to vector<16x16xbf16>
    %c0_20 = arith.constant 0 : index
    %c0_21 = arith.constant 0 : index
    %38 = vector.load %arg8[%c0_20, %c0_21] : memref<16x64xbf16, #tpu.memory_space<vmem>>, vector<16x64xbf16>
    %cst_22 = arith.constant dense<0.000000e+00> : vector<16x64xf32>
    %39 = tpu.matmul %37, %38, %cst_22 {dimension_numbers = #tpu.dot_dimension_numbers<[1], [0], [0], [1], [0, 0, 1, 1], [], []>} : vector<16x16xbf16>, vector<16x64xbf16>, vector<16x64xf32> -> vector<16x64xf32>
    %c0_23 = arith.constant 0 : index
    %c0_24 = arith.constant 0 : index
    %40 = vector.load %arg9[%c0_23, %c0_24] : memref<32x64xbf16, #tpu.memory_space<vmem>>, vector<32x64xbf16>
    %cst_25 = arith.constant dense<0.000000e+00> : vector<16x64xf32>
    %41 = tpu.matmul %0, %40, %cst_25 {dimension_numbers = #tpu.dot_dimension_numbers<[1], [0], [0], [1], [0, 0, 1, 1], [], []>} : vector<16x32xbf16>, vector<32x64xbf16>, vector<16x64xf32> -> vector<16x64xf32>
    %42 = arith.addf %39, %41 : vector<16x64xf32>
    %43 = vector.broadcast %11 : vector<1x64xf32> to vector<16x64xf32>
    %44 = arith.addf %42, %43 : vector<16x64xf32>
    %cst_26 = arith.constant 0.000000e+00 : f32
    %45 = vector.broadcast %cst_26 : f32 to vector<16x64xf32>
    %46 = arith.maximumf %44, %45 : vector<16x64xf32>
    %47 = arith.truncf %46 : vector<16x64xf32> to vector<16x64xbf16>
    %c0_27 = arith.constant 0 : index
    %c0_28 = arith.constant 0 : index
    %48 = vector.load %arg10[%c0_27, %c0_28] : memref<64x2xbf16, #tpu.memory_space<vmem>>, vector<64x2xbf16>
    %cst_29 = arith.constant dense<0.000000e+00> : vector<16x2xf32>
    %49 = tpu.matmul %47, %48, %cst_29 {dimension_numbers = #tpu.dot_dimension_numbers<[1], [0], [0], [1], [0, 0, 1, 1], [], []>} : vector<16x64xbf16>, vector<64x2xbf16>, vector<16x2xf32> -> vector<16x2xf32>
    %50 = vector.broadcast %12 : vector<1x2xf32> to vector<16x2xf32>
    %51 = arith.addf %49, %50 : vector<16x2xf32>
    %52 = arith.subf %51, %4 : vector<16x2xf32>
    %53 = arith.mulf %52, %52 : vector<16x2xf32>
    %54 = vector.broadcast %5 : vector<16x1xf32> to vector<16x2xf32>
    %55 = arith.mulf %53, %54 : vector<16x2xf32>
    %56 = vector.shape_cast %55 : vector<16x2xf32> to vector<1x16x2xf32>
    %cst_30 = arith.constant dense<0.000000e+00> : vector<1xf32>
    %57 = vector.multi_reduction <add>, %56, %cst_30 [1, 2] : vector<1x16x2xf32> to vector<1xf32>
    %58 = vector.shape_cast %57 : vector<1xf32> to vector<1x1x1xf32>
    %59 = vector.extract %58[0, 0, 0] : f32 from vector<1x1x1xf32>
    %cst_31 = arith.constant 1.000000e+00 : f32
    %60 = vector.broadcast %cst_31 : f32 to vector<16x16xf32>
    %61 = arith.addf %60, %31 : vector<16x16xf32>
    %62 = arith.mulf %27, %27 : vector<16x16xf32>
    %63 = arith.subf %61, %62 : vector<16x16xf32>
    %64 = arith.mulf %34, %34 : vector<16x16xf32>
    %65 = arith.subf %63, %64 : vector<16x16xf32>
    %66 = vector.broadcast %6 : vector<16x1xf32> to vector<16x16xf32>
    %67 = arith.mulf %65, %66 : vector<16x16xf32>
    %68 = vector.shape_cast %67 : vector<16x16xf32> to vector<1x16x16xf32>
    %cst_32 = arith.constant dense<0.000000e+00> : vector<1xf32>
    %69 = vector.multi_reduction <add>, %68, %cst_32 [1, 2] : vector<1x16x16xf32> to vector<1xf32>
    %70 = vector.shape_cast %69 : vector<1xf32> to vector<1x1x1xf32>
    %71 = vector.extract %70[0, 0, 0] : f32 from vector<1x1x1xf32>
    %cst_33 = arith.constant -5.000000e-01 : f32
    %72 = arith.mulf %cst_33, %71 : f32
    %73 = tpu.iota {dimensions = array<i32: 0>} : vector<8x128xi32>
    %c0_i32 = arith.constant 0 : i32
    %74 = vector.broadcast %c0_i32 : i32 to vector<8x128xi32>
    %75 = arith.cmpi eq, %73, %74 : vector<8x128xi32>
    %c1_i32 = arith.constant 1 : i32
    %76 = vector.broadcast %c1_i32 : i32 to vector<8x128xi32>
    %77 = arith.cmpi eq, %73, %76 : vector<8x128xi32>
    %cst_34 = arith.constant 0.000000e+00 : f32
    %78 = vector.broadcast %72 : f32 to vector<8x128xf32>
    %79 = vector.broadcast %cst_34 : f32 to vector<8x128xf32>
    %80 = arith.select %77, %78, %79 : vector<8x128xi1>, vector<8x128xf32>
    %81 = vector.broadcast %59 : f32 to vector<8x128xf32>
    %82 = arith.select %75, %81, %80 : vector<8x128xi1>, vector<8x128xf32>
    %83 = vector.shape_cast %82 : vector<8x128xf32> to vector<1x8x128xf32>
    %c0_35 = arith.constant 0 : index
    %c0_36 = arith.constant 0 : index
    %c0_37 = arith.constant 0 : index
    %84 = vector.load %arg12[%c0_35, %c0_36, %c0_37] : memref<1x8x128xf32, #tpu.memory_space<vmem>>, vector<1x8x128xf32>
    tpu.vector_store %arg12[%c0_35, %c0_36, %c0_37], %83 {strides = array<i32>} : memref<1x8x128xf32, #tpu.memory_space<vmem>>, vector<1x8x128xf32>,
    return
  }
  func.func @transform_0(%arg0: i32) -> (i32, i32) {
    %c0_i32 = arith.constant 0 : i32
    %c0_i32_0 = arith.constant 0 : i32
    return %arg0, %c0_i32 : i32, i32
  }
  func.func @transform_1(%arg0: i32) -> (i32, i32) {
    %c0_i32 = arith.constant 0 : i32
    %c0_i32_0 = arith.constant 0 : i32
    return %arg0, %c0_i32 : i32, i32
  }
  func.func @transform_2(%arg0: i32) -> (i32, i32) {
    %c0_i32 = arith.constant 0 : i32
    %c0_i32_0 = arith.constant 0 : i32
    return %arg0, %c0_i32 : i32, i32
  }
  func.func @transform_3(%arg0: i32) -> (i32, i32) {
    %c0_i32 = arith.constant 0 : i32
    %c0_i32_0 = arith.constant 0 : i32
    %c0_i32_1 = arith.constant 0 : i32
    return %c0_i32, %c0_i32_0 : i32, i32
  }
  func.func @transform_4(%arg0: i32) -> (i32, i32) {
    %c0_i32 = arith.constant 0 : i32
    %c0_i32_0 = arith.constant 0 : i32
    %c0_i32_1 = arith.constant 0 : i32
    return %c0_i32, %c0_i32_0 : i32, i32
  }
  func.func @transform_5(%arg0: i32) -> (i32, i32) {
    %c0_i32 = arith.constant 0 : i32
    %c0_i32_0 = arith.constant 0 : i32
    %c0_i32_1 = arith.constant 0 : i32
    return %c0_i32, %c0_i32_0 : i32, i32
  }
  func.func @transform_6(%arg0: i32) -> (i32, i32) {
    %c0_i32 = arith.constant 0 : i32
    %c0_i32_0 = arith.constant 0 : i32
    %c0_i32_1 = arith.constant 0 : i32
    return %c0_i32, %c0_i32_0 : i32, i32
  }
  func.func @transform_7(%arg0: i32) -> (i32, i32) {
    %c0_i32 = arith.constant 0 : i32
    %c0_i32_0 = arith.constant 0 : i32
    %c0_i32_1 = arith.constant 0 : i32
    return %c0_i32, %c0_i32_0 : i32, i32
  }
  func.func @transform_8(%arg0: i32) -> (i32, i32) {
    %c0_i32 = arith.constant 0 : i32
    %c0_i32_0 = arith.constant 0 : i32
    %c0_i32_1 = arith.constant 0 : i32
    return %c0_i32, %c0_i32_0 : i32, i32
  }
  func.func @transform_9(%arg0: i32) -> (i32, i32) {
    %c0_i32 = arith.constant 0 : i32
    %c0_i32_0 = arith.constant 0 : i32
    %c0_i32_1 = arith.constant 0 : i32
    return %c0_i32, %c0_i32_0 : i32, i32
  }
  func.func @transform_10(%arg0: i32) -> (i32, i32) {
    %c0_i32 = arith.constant 0 : i32
    %c0_i32_0 = arith.constant 0 : i32
    %c0_i32_1 = arith.constant 0 : i32
    return %c0_i32, %c0_i32_0 : i32, i32
  }
  func.func @transform_11(%arg0: i32) -> (i32, i32, i32) {
    %c0_i32 = arith.constant 0 : i32
    %c0_i32_0 = arith.constant 0 : i32
    %c0_i32_1 = arith.constant 0 : i32
    return %arg0, %c0_i32, %c0_i32_0 : i32, i32, i32
  }
}

</mosaic_0001>

<llo_original>
// kernel: tpu_custom_call.1
$region0: #{tpu_custom_call.1}
  #allocation0 [shape = 'u32[]', space=smem, size = 0x4, offset = 0x4, fixed_abs, tag = 'smem constant byte address 0x4 - core index']
  #allocation1 [shape = 'u32[144,128]{1,0:T(1,128)}', space=vmem, size = 0x12000, scoped, tag = 'internal scratch']
  %s0 = inlined_call_operand.vmem [shape: bf16[16,32], index: 0, kind: input, shape index: {}]
  %s1 = inlined_call_operand.vmem [shape: bf16[16,16], index: 1, kind: input, shape index: {}]
  %s2 = inlined_call_operand.vmem [shape: f32[16,4], index: 2, kind: input, shape index: {}]
  %s3 = inlined_call_operand.vmem [shape: bf16[32,64], index: 3, kind: input, shape index: {}]
  %s4 = inlined_call_operand.vmem [shape: bf16[2,64], index: 4, kind: input, shape index: {}]
  %s5 = inlined_call_operand.vmem [shape: bf16[64,16], index: 5, kind: input, shape index: {}]
  %s6 = inlined_call_operand.vmem [shape: bf16[64,16], index: 6, kind: input, shape index: {}]
  %s7 = inlined_call_operand.vmem [shape: bf16[16,64], index: 7, kind: input, shape index: {}]
  %s8 = inlined_call_operand.vmem [shape: bf16[32,64], index: 8, kind: input, shape index: {}]
  %s9 = inlined_call_operand.vmem [shape: bf16[64,2], index: 9, kind: input, shape index: {}]
  %s10 = inlined_call_operand.vmem [shape: f32[5,128], index: 10, kind: input, shape index: {}]
  %s11 = inlined_call_operand.hbm [shape: f32[1,8,128], index: 11, kind: output, shape index: {}]
  %s12 = sld [smem:[#allocation0]]
  $region54: #{tpu_custom_call.1} parent=0
    _
  %s14 = ssub.s32 1, %s12
  %s15 = scalar_select 0, %s14, %s12
  $region1: #{tpu_custom_call.1} parent=0
    #allocation2 [shape = 'u8[4096]{0}', space=vmem, size = 0x1000, scoped, tag = 'output window, operand 0, single buffered']
    #allocation3 [shape = 's32[1]{0}', space=sflag, size = 0x4, scoped, tag = 'scoped memory for tpu_custom_call.1']
    %16 = vsyncpa [#allocation3], 0
    // Predicated region
    $region2: #{tpu_custom_call.1} parent=1 // pred_check
      _
    $region3: #{tpu_custom_call.1} parent=1 // pred_check_branch
      %18 = sbr.rel (0) target = $region5
    $region4: #{tpu_custom_call.1} parent=1 // pred_region
      _
    $region5: #{tpu_custom_call.1} parent=1 // pred_fallthru
      _
    // Predicated region
    $region6: #{tpu_custom_call.1} parent=1 // pred_check
      _
    $region7: #{tpu_custom_call.1} parent=1 // pred_check_branch
      %20 = sbr.rel (0) target = $region9
    $region8: #{tpu_custom_call.1} parent=1 // pred_region
      _
    $region9: #{tpu_custom_call.1} parent=1 // pred_fallthru
      _
    // Predicated region
    $region10: #{tpu_custom_call.1} parent=1 // pred_check
      _
    $region11: #{tpu_custom_call.1} parent=1 // pred_check_branch
      %22 = sbr.rel (0) target = $region13
    $region12: #{tpu_custom_call.1} parent=1 // pred_region
      _
    $region13: #{tpu_custom_call.1} parent=1 // pred_fallthru
      _
    // Predicated region
    $region14: #{tpu_custom_call.1} parent=1 // pred_check
      _
    $region15: #{tpu_custom_call.1} parent=1 // pred_check_branch
      %24 = sbr.rel (0) target = $region17
    $region16: #{tpu_custom_call.1} parent=1 // pred_region
      _
    $region17: #{tpu_custom_call.1} parent=1 // pred_fallthru
      _
    // Predicated region
    $region18: #{tpu_custom_call.1} parent=1 // pred_check
      _
    $region19: #{tpu_custom_call.1} parent=1 // pred_check_branch
      %26 = sbr.rel (0) target = $region21
    $region20: #{tpu_custom_call.1} parent=1 // pred_region
      _
    $region21: #{tpu_custom_call.1} parent=1 // pred_fallthru
      _
    // Predicated region
    $region22: #{tpu_custom_call.1} parent=1 // pred_check
      _
    $region23: #{tpu_custom_call.1} parent=1 // pred_check_branch
      %28 = sbr.rel (0) target = $region25
    $region24: #{tpu_custom_call.1} parent=1 // pred_region
      _
    $region25: #{tpu_custom_call.1} parent=1 // pred_fallthru
      _
    // Predicated region
    $region26: #{tpu_custom_call.1} parent=1 // pred_check
      _
    $region27: #{tpu_custom_call.1} parent=1 // pred_check_branch
      %30 = sbr.rel (0) target = $region29
    $region28: #{tpu_custom_call.1} parent=1 // pred_region
      _
    $region29: #{tpu_custom_call.1} parent=1 // pred_fallthru
      _
    // Predicated region
    $region30: #{tpu_custom_call.1} parent=1 // pred_check
      _
    $region31: #{tpu_custom_call.1} parent=1 // pred_check_branch
      %32 = sbr.rel (0) target = $region33
    $region32: #{tpu_custom_call.1} parent=1 // pred_region
      _
    $region33: #{tpu_custom_call.1} parent=1 // pred_fallthru
      _
    // Predicated region
    $region34: #{tpu_custom_call.1} parent=1 // pred_check
      _
    $region35: #{tpu_custom_call.1} parent=1 // pred_check_branch
      %34 = sbr.rel (0) target = $region37
    $region36: #{tpu_custom_call.1} parent=1 // pred_region
      _
    $region37: #{tpu_custom_call.1} parent=1 // pred_fallthru
      _
    // Predicated region
    $region38: #{tpu_custom_call.1} parent=1 // pred_check
      _
    $region39: #{tpu_custom_call.1} parent=1 // pred_check_branch
      %36 = sbr.rel (0) target = $region41
    $region40: #{tpu_custom_call.1} parent=1 // pred_region
      _
    $region41: #{tpu_custom_call.1} parent=1 // pred_fallthru
      _
    // Predicated region
    $region42: #{tpu_custom_call.1} parent=1 // pred_check
      _
    $region43: #{tpu_custom_call.1} parent=1 // pred_check_branch
      %38 = sbr.rel (0) target = $region45
    $region44: #{tpu_custom_call.1} parent=1 // pred_region
      _
    $region45: #{tpu_custom_call.1} parent=1 // pred_fallthru
      _
    %v40 = vld [vmem:[%s0] sm:$0xf]
    %v41 = vld [vmem:[%s0 + $0x4] sm:$0xf]
    %v42 = vld [vmem:[%s1] sm:$0xf]
    %v43 = vld [vmem:[%s1 + $0x4] sm:$0xf]
    %v44 = vunpack.c.l.bf16 %v42
    %v45 = vunpack.c.l.bf16 %v43
    %v46 = vld [vmem:[%s2] sm:$0xff]
    %v47 = vld [vmem:[%s2 + $0x8] sm:$0xff]
    %v48 = vld [vmem:[%s10] sm:$0x1f]
    %v49 = vld [vmem:[%s3] sm:$0xf]
    %v50 = vld [vmem:[%s3 + $0x4] sm:$0xf]
    %v51 = vld [vmem:[%s3 + $0x8] sm:$0xf]
    %v52 = vld [vmem:[%s3 + $0xc] sm:$0xf]
    %v53 = vpack.c.bf16 %v47, %v46
    %v54 = vld [vmem:[%s4] sm:$0x1]
    %vm55 = vcmask 15360
    %v57 = vsel %vm55, %v53, 0
    %vm59 = vcmask 1040384
    %v61 = vsel %vm59, %v54, 0
    %63 = vmatprep.subr.bf16.mxu0 0
    %64 = vmatpush1.bf16.msra.mxu0 %v61
    %65 = vmatprep.subr.bf16.mxu0 0
    %66 = vmatpush1.bf16.msra.mxu0 0
    %67 = vmatprep.subr.bf16.mxu0 0
    %68 = vmatpush1.bf16.msra.mxu0 0
    %69 = vmatprep.subr.bf16.mxu0 0
    %70 = vmatpush1.bf16.msra.mxu0 0
    %71 = vmatprep.subr.bf16.mxu0 0
    %72 = vmatpush1.bf16.msra.mxu0 0
    %73 = vmatprep.subr.bf16.mxu0 0
    %74 = vmatpush1.bf16.msra.mxu0 0
    %75 = vmatprep.subr.bf16.mxu0 0
    %76 = vmatpush1.bf16.msra.mxu0 0
    %77 = vmatprep.subr.bf16.mxu0 0
    %78 = vmatpush1.bf16.msra.mxu0 0
    %79 = vmatprep.subr.bf16.mxu0 0
    %80 = vmatpush1.bf16.msra.mxu0 0
    %81 = vmatprep.subr.bf16.mxu0 0
    %82 = vmatpush1.bf16.msra.mxu0 0
    %83 = vmatprep.subr.bf16.mxu0 0
    %84 = vmatpush1.bf16.msra.mxu0 0
    %85 = vmatprep.subr.bf16.mxu0 0
    %86 = vmatpush1.bf16.msra.mxu0 0
    %87 = vmatprep.subr.bf16.mxu0 0
    %88 = vmatpush1.bf16.msra.mxu0 0
    %89 = vmatprep.subr.bf16.mxu0 0
    %90 = vmatpush1.bf16.msra.mxu0 0
    %91 = vmatprep.subr.bf16.mxu0 0
    %92 = vmatpush1.bf16.msra.mxu0 0
    %93 = vmatprep.subr.bf16.mxu0 0
    %94 = vmatpush1.bf16.msra.mxu0 0
    %95 = vmatprep.mubr.bf16.mxu0 0
    %96 = vmatmul.mubr.bf16.gmra.mrb[0].mxu0 %v57
    %v97 = vpop.f32.mrb[0].mxu0
    %v98 = vadd.f32 0.0, %v97
    %v99 = vpop.f32.mrb[0].mxu0
    %v100 = vpop.f32.mrb[0].mxu0
    %v101 = vadd.f32 0.0, %v100
    %v102 = vpop.f32.mrb[0].mxu0
    %103 = vdwg.mxu0
    %v106 = vunpack.c.l.b16 %v40
    %v107 = vunpack.c.l.b16 %v41
    %v108 = vpack.c.b16 %v107, %v106
    %v113 = vunpack.c.l.b16 %v49
    %v114 = vunpack.c.l.b16 %v50
    %v115 = vunpack.c.l.b16 %v51
    %v116 = vunpack.c.l.b16 %v52
    %v117 = vpack.c.b16 %v114, %v113
    %v118 = vpack.c.b16 %v116, %v115
    %vm121 = vcmask 261120
    %v123 = vsel %vm121, %v108, 0
    %125 = vmatprep.subr.bf16.mxu0 0
    %126 = vmatpush1.bf16.msra.mxu0 %v117
    %127 = vmatprep.subr.bf16.mxu0 0
    %128 = vmatpush1.bf16.msra.mxu0 %v118
    %129 = vmatprep.subr.bf16.mxu0 0
    %130 = vmatpush1.bf16.msra.mxu0 0
    %131 = vmatprep.subr.bf16.mxu0 0
    %132 = vmatpush1.bf16.msra.mxu0 0
    %133 = vmatprep.subr.bf16.mxu0 0
    %134 = vmatpush1.bf16.msra.mxu0 0
    %135 = vmatprep.subr.bf16.mxu0 0
    %136 = vmatpush1.bf16.msra.mxu0 0
    %137 = vmatprep.subr.bf16.mxu0 0
    %138 = vmatpush1.bf16.msra.mxu0 0
    %139 = vmatprep.subr.bf16.mxu0 0
    %140 = vmatpush1.bf16.msra.mxu0 0
    %141 = vmatprep.subr.bf16.mxu0 0
    %142 = vmatpush1.bf16.msra.mxu0 0
    %143 = vmatprep.subr.bf16.mxu0 0
    %144 = vmatpush1.bf16.msra.mxu0 0
    %145 = vmatprep.subr.bf16.mxu0 0
    %146 = vmatpush1.bf16.msra.mxu0 0
    %147 = vmatprep.subr.bf16.mxu0 0
    %148 = vmatpush1.bf16.msra.mxu0 0
    %149 = vmatprep.subr.bf16.mxu0 0
    %150 = vmatpush1.bf16.msra.mxu0 0
    %151 = vmatprep.subr.bf16.mxu0 0
    %152 = vmatpush1.bf16.msra.mxu0 0
    %153 = vmatprep.subr.bf16.mxu0 0
    %154 = vmatpush1.bf16.msra.mxu0 0
    %155 = vmatprep.subr.bf16.mxu0 0
    %156 = vmatpush1.bf16.msra.mxu0 0
    %157 = vmatprep.mubr.bf16.mxu0 0
    %158 = vmatmul.mubr.bf16.gmra.mrb[0].mxu0 %v123
    %v159 = vpop.f32.mrb[0].mxu0
    %v160 = vadd.f32 %v98, %v159
    %v161 = vpop.f32.mrb[0].mxu0
    %v162 = vpop.f32.mrb[0].mxu0
    %v163 = vadd.f32 %v101, %v162
    %v164 = vpop.f32.mrb[0].mxu0
    %165 = vdwg.mxu0
    %v166 = vlaneseq
    %v167 = vshrl.u32 %v166, 7
    %v168 = vsub.s32 0, %v167
    %v169 = vrot.slane %v48, %v168
    %v170 = vadd.f32 %v160, %v169
    %v171 = vadd.f32 %v163, %v169
    %v172 = vmax.f32 %v170, 0.0
    %v173 = vmax.f32 %v171, 0.0
    %v174 = vpack.c.bf16 %v173, %v172
    %v175 = vld [vmem:[%s5] sm:$0xf]
    %v176 = vld [vmem:[%s5 + $0x4] sm:$0xf]
    %v177 = vld [vmem:[%s5 + $0x8] sm:$0xf]
    %v178 = vld [vmem:[%s5 + $0xc] sm:$0xf]
    %v179 = vld [vmem:[%s5 + $0x10] sm:$0xf]
    %v180 = vld [vmem:[%s5 + $0x14] sm:$0xf]
    %v181 = vld [vmem:[%s5 + $0x18] sm:$0xf]
    %v182 = vld [vmem:[%s5 + $0x1c] sm:$0xf]
    %v183 = vlaneseq
    %v184 = vshrl.u32 %v183, 7
    %v185 = vsub.s32 1, %v184
    %v186 = vrot.slane %v48, %v185
    %v195 = vunpack.c.l.b16 %v175
    %v196 = vunpack.c.l.b16 %v176
    %v197 = vunpack.c.l.b16 %v177
    %v198 = vunpack.c.l.b16 %v178
    %v199 = vunpack.c.l.b16 %v179
    %v200 = vunpack.c.l.b16 %v180
    %v201 = vunpack.c.l.b16 %v181
    %v202 = vunpack.c.l.b16 %v182
    %v203 = vpack.c.b16 %v196, %v195
    %v204 = vpack.c.b16 %v198, %v197
    %v205 = vpack.c.b16 %v200, %v199
    %v206 = vpack.c.b16 %v202, %v201
    %vm211 = vcmask 523264
    %v213 = vsel %vm211, %v174, 0
    %215 = vmatprep.subr.bf16.mxu0 0
    %216 = vmatpush1.bf16.msra.mxu0 %v203
    %217 = vmatprep.subr.bf16.mxu0 0
    %218 = vmatpush1.bf16.msra.mxu0 %v204
    %219 = vmatprep.subr.bf16.mxu0 0
    %220 = vmatpush1.bf16.msra.mxu0 %v205
    %221 = vmatprep.subr.bf16.mxu0 0
    %222 = vmatpush1.bf16.msra.mxu0 %v206
    %223 = vmatprep.subr.bf16.mxu0 0
    %224 = vmatpush1.bf16.msra.mxu0 0
    %225 = vmatprep.subr.bf16.mxu0 0
    %226 = vmatpush1.bf16.msra.mxu0 0
    %227 = vmatprep.subr.bf16.mxu0 0
    %228 = vmatpush1.bf16.msra.mxu0 0
    %229 = vmatprep.subr.bf16.mxu0 0
    %230 = vmatpush1.bf16.msra.mxu0 0
    %231 = vmatprep.subr.bf16.mxu0 0
    %232 = vmatpush1.bf16.msra.mxu0 0
    %233 = vmatprep.subr.bf16.mxu0 0
    %234 = vmatpush1.bf16.msra.mxu0 0
    %235 = vmatprep.subr.bf16.mxu0 0
    %236 = vmatpush1.bf16.msra.mxu0 0
    %237 = vmatprep.subr.bf16.mxu0 0
    %238 = vmatpush1.bf16.msra.mxu0 0
    %239 = vmatprep.subr.bf16.mxu0 0
    %240 = vmatpush1.bf16.msra.mxu0 0
    %241 = vmatprep.subr.bf16.mxu0 0
    %242 = vmatpush1.bf16.msra.mxu0 0
    %243 = vmatprep.subr.bf16.mxu0 0
    %244 = vmatpush1.bf16.msra.mxu0 0
    %245 = vmatprep.subr.bf16.mxu0 0
    %246 = vmatpush1.bf16.msra.mxu0 0
    %247 = vmatprep.mubr.bf16.mxu0 0
    %248 = vmatmul.mubr.bf16.gmra.mrb[0].mxu0 %v213
    %v249 = vpop.f32.mrb[0].mxu0
    %v250 = vadd.f32 %v186, %v249
    %v251 = vpop.f32.mrb[0].mxu0
    %v252 = vpop.f32.mrb[0].mxu0
    %v253 = vadd.f32 %v186, %v252
    %v254 = vpop.f32.mrb[0].mxu0
    %255 = vdwg.mxu0
    %v256 = vld [vmem:[%s6] sm:$0xf]
    %v257 = vld [vmem:[%s6 + $0x4] sm:$0xf]
    %v258 = vld [vmem:[%s6 + $0x8] sm:$0xf]
    %v259 = vld [vmem:[%s6 + $0xc] sm:$0xf]
    %v260 = vld [vmem:[%s6 + $0x10] sm:$0xf]
    %v261 = vld [vmem:[%s6 + $0x14] sm:$0xf]
    %v262 = vld [vmem:[%s6 + $0x18] sm:$0xf]
    %v263 = vld [vmem:[%s6 + $0x1c] sm:$0xf]
    %v264 = vlaneseq
    %v265 = vshrl.u32 %v264, 7
    %v266 = vsub.s32 2, %v265
    %v267 = vrot.slane %v48, %v266
    %v276 = vunpack.c.l.b16 %v256
    %v277 = vunpack.c.l.b16 %v257
    %v278 = vunpack.c.l.b16 %v258
    %v279 = vunpack.c.l.b16 %v259
    %v280 = vunpack.c.l.b16 %v260
    %v281 = vunpack.c.l.b16 %v261
    %v282 = vunpack.c.l.b16 %v262
    %v283 = vunpack.c.l.b16 %v263
    %v284 = vpack.c.b16 %v277, %v276
    %v285 = vpack.c.b16 %v279, %v278
    %v286 = vpack.c.b16 %v281, %v280
    %v287 = vpack.c.b16 %v283, %v282
    %292 = vmatprep.subr.bf16.mxu0 0
    %293 = vmatpush1.bf16.msra.mxu0 %v284
    %294 = vmatprep.subr.bf16.mxu0 0
    %295 = vmatpush1.bf16.msra.mxu0 %v285
    %296 = vmatprep.subr.bf16.mxu0 0
    %297 = vmatpush1.bf16.msra.mxu0 %v286
    %298 = vmatprep.subr.bf16.mxu0 0
    %299 = vmatpush1.bf16.msra.mxu0 %v287
    %300 = vmatprep.subr.bf16.mxu0 0
    %301 = vmatpush1.bf16.msra.mxu0 0
    %302 = vmatprep.subr.bf16.mxu0 0
    %303 = vmatpush1.bf16.msra.mxu0 0
    %304 = vmatprep.subr.bf16.mxu0 0
    %305 = vmatpush1.bf16.msra.mxu0 0
    %306 = vmatprep.subr.bf16.mxu0 0
    %307 = vmatpush1.bf16.msra.mxu0 0
    %308 = vmatprep.subr.bf16.mxu0 0
    %309 = vmatpush1.bf16.msra.mxu0 0
    %310 = vmatprep.subr.bf16.mxu0 0
    %311 = vmatpush1.bf16.msra.mxu0 0
    %312 = vmatprep.subr.bf16.mxu0 0
    %313 = vmatpush1.bf16.msra.mxu0 0
    %314 = vmatprep.subr.bf16.mxu0 0
    %315 = vmatpush1.bf16.msra.mxu0 0
    %316 = vmatprep.subr.bf16.mxu0 0
    %317 = vmatpush1.bf16.msra.mxu0 0
    %318 = vmatprep.subr.bf16.mxu0 0
    %319 = vmatpush1.bf16.msra.mxu0 0
    %320 = vmatprep.subr.bf16.mxu0 0
    %321 = vmatpush1.bf16.msra.mxu0 0
    %322 = vmatprep.subr.bf16.mxu0 0
    %323 = vmatpush1.bf16.msra.mxu0 0
    %324 = vmatprep.mubr.bf16.mxu0 0
    %325 = vmatmul.mubr.bf16.gmra.mrb[0].mxu0 %v213
    %v326 = vpop.f32.mrb[0].mxu0
    %v327 = vadd.f32 %v267, %v326
    %v328 = vpop.f32.mrb[0].mxu0
    %v329 = vpop.f32.mrb[0].mxu0
    %v330 = vadd.f32 %v267, %v329
    %v331 = vpop.f32.mrb[0].mxu0
    %332 = vdwg.mxu0
    %v333 = vmul.f32 %v327, 0.5
    %v334 = vmul.f32 %v330, 0.5
    %v335 = vmul.f32 %v333, 1.442695
    %v336 = vpow.pop %v335
    %v337 = vmul.f32 %v334, 1.442695
    %v338 = vpow.pop %v337
    %v339 = vmul.f32 %v336, %v44
    %v340 = vmul.f32 %v338, %v45
    %v341 = vadd.f32 %v250, %v339
    %v342 = vadd.f32 %v253, %v340
    %v343 = vpack.c.bf16 %v342, %v341
    %v344 = vld [vmem:[%s7] sm:$0xf]
    %v345 = vld [vmem:[%s7 + $0x4] sm:$0xf]
    %v346 = vld [vmem:[%s8] sm:$0xf]
    %v347 = vld [vmem:[%s8 + $0x4] sm:$0xf]
    %v348 = vld [vmem:[%s8 + $0x8] sm:$0xf]
    %v349 = vld [vmem:[%s8 + $0xc] sm:$0xf]
    %v354 = vunpack.c.l.b16 %v346
    %v355 = vunpack.c.l.b16 %v347
    %v356 = vunpack.c.l.b16 %v348
    %v357 = vunpack.c.l.b16 %v349
    %v358 = vpack.c.b16 %v355, %v354
    %v359 = vpack.c.b16 %v357, %v356
    %362 = vmatprep.subr.bf16.mxu0 0
    %363 = vmatpush1.bf16.msra.mxu0 %v358
    %364 = vmatprep.subr.bf16.mxu0 0
    %365 = vmatpush1.bf16.msra.mxu0 %v359
    %366 = vmatprep.subr.bf16.mxu0 0
    %367 = vmatpush1.bf16.msra.mxu0 0
    %368 = vmatprep.subr.bf16.mxu0 0
    %369 = vmatpush1.bf16.msra.mxu0 0
    %370 = vmatprep.subr.bf16.mxu0 0
    %371 = vmatpush1.bf16.msra.mxu0 0
    %372 = vmatprep.subr.bf16.mxu0 0
    %373 = vmatpush1.bf16.msra.mxu0 0
    %374 = vmatprep.subr.bf16.mxu0 0
    %375 = vmatpush1.bf16.msra.mxu0 0
    %376 = vmatprep.subr.bf16.mxu0 0
    %377 = vmatpush1.bf16.msra.mxu0 0
    %378 = vmatprep.subr.bf16.mxu0 0
    %379 = vmatpush1.bf16.msra.mxu0 0
    %380 = vmatprep.subr.bf16.mxu0 0
    %381 = vmatpush1.bf16.msra.mxu0 0
    %382 = vmatprep.subr.bf16.mxu0 0
    %383 = vmatpush1.bf16.msra.mxu0 0
    %384 = vmatprep.subr.bf16.mxu0 0
    %385 = vmatpush1.bf16.msra.mxu0 0
    %386 = vmatprep.subr.bf16.mxu0 0
    %387 = vmatpush1.bf16.msra.mxu0 0
    %388 = vmatprep.subr.bf16.mxu0 0
    %389 = vmatpush1.bf16.msra.mxu0 0
    %390 = vmatprep.subr.bf16.mxu0 0
    %391 = vmatpush1.bf16.msra.mxu0 0
    %392 = vmatprep.subr.bf16.mxu0 0
    %393 = vmatpush1.bf16.msra.mxu0 0
    %394 = vmatprep.mubr.bf16.mxu0 0
    %395 = vmatmul.mubr.bf16.gmra.mrb[0].mxu0 %v123
    %v396 = vpop.f32.mrb[0].mxu0
    %v397 = vadd.f32 0.0, %v396
    %v398 = vpop.f32.mrb[0].mxu0
    %v399 = vpop.f32.mrb[0].mxu0
    %v400 = vadd.f32 0.0, %v399
    %v401 = vpop.f32.mrb[0].mxu0
    %402 = vdwg.mxu0
    %v405 = vunpack.c.l.b16 %v344
    %v406 = vunpack.c.l.b16 %v345
    %v407 = vpack.c.b16 %v406, %v405
    %vm409 = vcmask 130048
    %v411 = vsel %vm409, %v343, 0
    %413 = vmatprep.subr.bf16.mxu0 0
    %414 = vmatpush1.bf16.msra.mxu0 %v407
    %415 = vmatprep.subr.bf16.mxu0 0
    %416 = vmatpush1.bf16.msra.mxu0 0
    %417 = vmatprep.subr.bf16.mxu0 0
    %418 = vmatpush1.bf16.msra.mxu0 0
    %419 = vmatprep.subr.bf16.mxu0 0
    %420 = vmatpush1.bf16.msra.mxu0 0
    %421 = vmatprep.subr.bf16.mxu0 0
    %422 = vmatpush1.bf16.msra.mxu0 0
    %423 = vmatprep.subr.bf16.mxu0 0
    %424 = vmatpush1.bf16.msra.mxu0 0
    %425 = vmatprep.subr.bf16.mxu0 0
    %426 = vmatpush1.bf16.msra.mxu0 0
    %427 = vmatprep.subr.bf16.mxu0 0
    %428 = vmatpush1.bf16.msra.mxu0 0
    %429 = vmatprep.subr.bf16.mxu0 0
    %430 = vmatpush1.bf16.msra.mxu0 0
    %431 = vmatprep.subr.bf16.mxu0 0
    %432 = vmatpush1.bf16.msra.mxu0 0
    %433 = vmatprep.subr.bf16.mxu0 0
    %434 = vmatpush1.bf16.msra.mxu0 0
    %435 = vmatprep.subr.bf16.mxu0 0
    %436 = vmatpush1.bf16.msra.mxu0 0
    %437 = vmatprep.subr.bf16.mxu0 0
    %438 = vmatpush1.bf16.msra.mxu0 0
    %439 = vmatprep.subr.bf16.mxu0 0
    %440 = vmatpush1.bf16.msra.mxu0 0
    %441 = vmatprep.subr.bf16.mxu0 0
    %442 = vmatpush1.bf16.msra.mxu0 0
    %443 = vmatprep.subr.bf16.mxu0 0
    %444 = vmatpush1.bf16.msra.mxu0 0
    %445 = vmatprep.mubr.bf16.mxu0 0
    %446 = vmatmul.mubr.bf16.gmra.mrb[0].mxu0 %v411
    %v447 = vpop.f32.mrb[0].mxu0
    %v448 = vadd.f32 %v397, %v447
    %v449 = vpop.f32.mrb[0].mxu0
    %v450 = vpop.f32.mrb[0].mxu0
    %v451 = vadd.f32 %v400, %v450
    %v452 = vpop.f32.mrb[0].mxu0
    %453 = vdwg.mxu0
    %v454 = vlaneseq
    %v455 = vshrl.u32 %v454, 7
    %v456 = vsub.s32 3, %v455
    %v457 = vrot.slane %v48, %v456
    %v458 = vadd.f32 %v448, %v457
    %v459 = vadd.f32 %v451, %v457
    %v460 = vmax.f32 %v458, 0.0
    %v461 = vmax.f32 %v459, 0.0
    %v462 = vpack.c.bf16 %v461, %v460
    %v463 = vld [vmem:[%s9] sm:$0xf]
    %v464 = vld [vmem:[%s9 + $0x4] sm:$0xf]
    %v465 = vld [vmem:[%s9 + $0x8] sm:$0xf]
    %v466 = vld [vmem:[%s9 + $0xc] sm:$0xf]
    %v467 = vld [vmem:[%s9 + $0x10] sm:$0xf]
    %v468 = vld [vmem:[%s9 + $0x14] sm:$0xf]
    %v469 = vld [vmem:[%s9 + $0x18] sm:$0xf]
    %v470 = vld [vmem:[%s9 + $0x1c] sm:$0xf]
    %v471 = vlaneseq
    %v472 = vshrl.u32 %v471, 7
    %v473 = vsub.s32 4, %v472
    %v474 = vrot.slane %v48, %v473
    %v483 = vunpack.c.l.b16 %v463
    %v484 = vunpack.c.l.b16 %v464
    %v485 = vunpack.c.l.b16 %v465
    %v486 = vunpack.c.l.b16 %v466
    %v487 = vunpack.c.l.b16 %v467
    %v488 = vunpack.c.l.b16 %v468
    %v489 = vunpack.c.l.b16 %v469
    %v490 = vunpack.c.l.b16 %v470
    %v491 = vpack.c.b16 %v484, %v483
    %v492 = vpack.c.b16 %v486, %v485
    %v493 = vpack.c.b16 %v488, %v487
    %v494 = vpack.c.b16 %v490, %v489
    %v500 = vsel %vm211, %v462, 0
    %502 = vmatprep.subr.bf16.mxu0 0
    %503 = vmatpush1.bf16.msra.mxu0 %v491
    %504 = vmatprep.subr.bf16.mxu0 0
    %505 = vmatpush1.bf16.msra.mxu0 %v492
    %506 = vmatprep.subr.bf16.mxu0 0
    %507 = vmatpush1.bf16.msra.mxu0 %v493
    %508 = vmatprep.subr.bf16.mxu0 0
    %509 = vmatpush1.bf16.msra.mxu0 %v494
    %510 = vmatprep.subr.bf16.mxu0 0
    %511 = vmatpush1.bf16.msra.mxu0 0
    %512 = vmatprep.subr.bf16.mxu0 0
    %513 = vmatpush1.bf16.msra.mxu0 0
    %514 = vmatprep.subr.bf16.mxu0 0
    %515 = vmatpush1.bf16.msra.mxu0 0
    %516 = vmatprep.subr.bf16.mxu0 0
    %517 = vmatpush1.bf16.msra.mxu0 0
    %518 = vmatprep.subr.bf16.mxu0 0
    %519 = vmatpush1.bf16.msra.mxu0 0
    %520 = vmatprep.subr.bf16.mxu0 0
    %521 = vmatpush1.bf16.msra.mxu0 0
    %522 = vmatprep.subr.bf16.mxu0 0
    %523 = vmatpush1.bf16.msra.mxu0 0
    %524 = vmatprep.subr.bf16.mxu0 0
    %525 = vmatpush1.bf16.msra.mxu0 0
    %526 = vmatprep.subr.bf16.mxu0 0
    %527 = vmatpush1.bf16.msra.mxu0 0
    %528 = vmatprep.subr.bf16.mxu0 0
    %529 = vmatpush1.bf16.msra.mxu0 0
    %530 = vmatprep.subr.bf16.mxu0 0
    %531 = vmatpush1.bf16.msra.mxu0 0
    %532 = vmatprep.subr.bf16.mxu0 0
    %533 = vmatpush1.bf16.msra.mxu0 0
    %534 = vmatprep.mubr.bf16.mxu0 0
    %535 = vmatmul.mubr.bf16.gmra.mrb[0].mxu0 %v500
    %v536 = vpop.f32.mrb[0].mxu0
    %v537 = vadd.f32 %v474, %v536
    %v538 = vpop.f32.mrb[0].mxu0
    %v539 = vpop.f32.mrb[0].mxu0
    %v540 = vadd.f32 %v474, %v539
    %v541 = vpop.f32.mrb[0].mxu0
    %542 = vdwg.mxu0
    %v543 = vsub.f32 %v537, %v46
    %v544 = vsub.f32 %v540, %v47
    %v545 = vmul.f32 %v543, %v543
    %v546 = vmul.f32 %v544, %v544
    %548 = vset.pattern.permute.xlu0 2
    %549 = vperm.xlu0 %548, %v46
    %v550 = vpop.permute.xlu0 %549
    %553 = vset.pattern.permute.xlu0 2
    %554 = vperm.xlu0 %553, %v47
    %v555 = vpop.permute.xlu0 %554
    %v557 = vmul.f32 %v545, %v550
    %v558 = vmul.f32 %v546, %v555
    %v559 = vsel %vm55, %v557, 0.0
    %v560 = vsel %vm55, %v558, 0.0
    %v561 = vadd.f32 %v559, %v560
    %562 = vadd.xlane.f32.xlu0 %v561
    %v563 = vpop.xlane.xlu0 %562
    %v564 = vrot.slane %v563, 4
    %v565 = vadd.f32 %v563, %v564
    %v566 = vrot.slane %v565, 2
    %v567 = vadd.f32 %v565, %v566
    %v568 = vrot.slane %v567, 1
    %v569 = vadd.f32 %v567, %v568
    %s570 = vtos %v569
    %v571 = vadd.f32 %v327, 1.0
    %v572 = vadd.f32 %v330, 1.0
    %v573 = vmul.f32 %v250, %v250
    %v574 = vmul.f32 %v253, %v253
    %v575 = vsub.f32 %v571, %v573
    %v576 = vsub.f32 %v572, %v574
    %v577 = vmul.f32 %v336, %v336
    %v578 = vmul.f32 %v338, %v338
    %v579 = vsub.f32 %v575, %v577
    %v580 = vsub.f32 %v576, %v578
    %581 = vset.pattern.permute.xlu0 3
    %582 = vperm.xlu0 %581, %v46
    %v583 = vpop.permute.xlu0 %582
    %585 = vset.pattern.permute.xlu0 3
    %586 = vperm.xlu0 %585, %v47
    %v587 = vpop.permute.xlu0 %586
    %v589 = vmul.f32 %v579, %v583
    %v590 = vmul.f32 %v580, %v587
    %v591 = vsel %vm409, %v589, 0.0
    %v592 = vsel %vm409, %v590, 0.0
    %v593 = vadd.f32 %v591, %v592
    %594 = vadd.xlane.f32.xlu0 %v593
    %v595 = vpop.xlane.xlu0 %594
    %v596 = vrot.slane %v595, 4
    %v597 = vadd.f32 %v595, %v596
    %v598 = vrot.slane %v597, 2
    %v599 = vadd.f32 %v597, %v598
    %v600 = vrot.slane %v599, 1
    %v601 = vadd.f32 %v599, %v600
    %s602 = vtos %v601
    %s603 = smul.f32 %s602, -0.5
    %v604 = vlaneseq
    %v605 = vshrl.u32 %v604, 7
    %vm606 = vcmp.eq.s32.totalorder %v605, 0
    %vm607 = vcmp.eq.s32.totalorder %v605, 1
    %v608 = vstv %s603
    %v609 = vsel %vm607, %v608, 0.0
    %v610 = vstv %s570
    %v611 = vsel %vm606, %v610, %v609
    %612 = vst [vmem:[#allocation2] sm:$0xff] %v611
    // Predicated region
    $region46: #{tpu_custom_call.1} parent=1 // pred_check
      _
    $region47: #{tpu_custom_call.1} parent=1 // pred_check_branch
      %614 = sbr.rel (0) target = $region49
    $region48: #{tpu_custom_call.1} parent=1 // pred_region
      %s616 = ssub.s32 128, 128
      %617 = vsyncadd [#allocation3], %s616
      %s619 = sshll.u32 [#allocation2], 4
      %s620 = int_to_ptr.vmem [resolvable:$true] %s619
      %622 = dma.vmem_to_hbm [thread:$0]  %s620, 128, %s11, [#allocation3]
    $region49: #{tpu_custom_call.1} parent=1 // pred_fallthru
      _
    // Predicated region
    $region50: #{tpu_custom_call.1} parent=1 // pred_check
      _
    $region51: #{tpu_custom_call.1} parent=1 // pred_check_branch
      %624 = sbr.rel (0) target = $region53
    $region52: #{tpu_custom_call.1} parent=1 // pred_region
      %625 = dma.done [#allocation3], 128
    $region53: #{tpu_custom_call.1} parent=1 // pred_fallthru
      _
    %626 = vsyncpa [#allocation3], 1

</llo_original>
